<compile_context>
chip_gen: v6e
topology: v6e:2x2x1
jax: 0.10.0
libtpu: 0.0.40
codegen_flags: <defaults>
</compile_context>

<pallas_src>
import jax
import jax.numpy as jnp
from jax import lax
from jax.experimental import pallas as pl
from jax.experimental.pallas import tpu as pltpu


def _round_up(x, m):
    return ((x + m - 1) // m) * m


def valuenet_kernel(x_ref, w1_ref, b1_ref, w2_ref, b2_ref, w3t_ref, b3_ref, o_ref):
    cdt = w1_ref.dtype  # matmul-input dtype; weights were pre-cast in the wrapper

    # Layer 1 + ReLU (MXU matmul, f32 accumulation; bias/ReLU in f32).
    x = x_ref[...].astype(cdt)
    h1 = jnp.dot(x, w1_ref[...], preferred_element_type=jnp.float32)
    h1 = jnp.maximum(h1 + b1_ref[...], 0.0)

    # Layer 2 + ReLU.
    h2 = jnp.dot(h1.astype(cdt), w2_ref[...], preferred_element_type=jnp.float32)
    h2 = jnp.maximum(h2 + b2_ref[...], 0.0)

    # Layer 3 (256 -> 1): NT matmul (1, H) x (tb, H)^T -> (1, tb); the result is
    # already lane-dense for the (1, 1, tb) output block (no XLU relayout).
    v = lax.dot_general(w3t_ref[...], h2,
                        dimension_numbers=(((1,), (1,)), ((), ())),
                        preferred_element_type=jnp.float32)
    v = v + b3_ref[0, 0]                       # scalar bias from SMEM
    o_ref[...] = v.reshape(o_ref.shape).astype(o_ref.dtype)


def value_net_forward(x, params, *, tb=None, compute_dtype=jnp.bfloat16):
    """x: [B, state_dim] float32. Returns [B, 1] float32.

    compute_dtype controls the MXU-input dtype of layers 1/2 (accumulation is
    always f32). bf16 (default) is the fast path on v5e/v6e/v7x; pass
    jnp.float32 for outputs that match the f32 reference tightly.
    """
    w1, b1, w2, b2, w3, b3 = params
    B, S = x.shape
    H = w1.shape[1]                      # 256

    # Batch tile: lane-aligned (multiple of 128). Large tiles amortize the
    # ~0.35 us per-grid-step overhead; the cdiv(B, 2) cap keeps >= 2 tiles when
    # B is big enough so v7x's two TensorCores both get work.
    if tb is None:
        tb = min(2048, _round_up(max(-(-B // 2), 1), 128))
    tb = _round_up(tb, 128)
    Bp = _round_up(B, tb)
    num_tiles = Bp // tb

    # Zero-pad the batch only when needed (the pad is an extra pass over x).
    # state_dim is not padded: the x block's last dim equals the array dim.
    x_p = x if Bp == B else jnp.zeros((Bp, S), x.dtype).at[:B, :].set(x)

    # Pre-cast the resident weights once (avoids per-grid-step casts in-kernel
    # and halves their VMEM footprint in bf16 mode). Biases / final layer: f32.
    w1c = w1.astype(compute_dtype)
    w2c = w2.astype(compute_dtype)
    w3t = w3.reshape(1, H).astype(jnp.float32)

    flops = 2 * Bp * (S * H + H * H + H)
    bytes_accessed = (
        x_p.size * x_p.dtype.itemsize
        + w1c.size * w1c.dtype.itemsize + w2c.size * w2c.dtype.itemsize
        + (b1.size + b2.size + w3t.size + b3.size) * 4
        + Bp * 4)

    out = pl.pallas_call(
        valuenet_kernel,
        out_shape=jax.ShapeDtypeStruct((num_tiles, 1, tb), jnp.float32),
        grid_spec=pltpu.PrefetchScalarGridSpec(
            num_scalar_prefetch=0,
            grid=(num_tiles,),
            in_specs=[
                pl.BlockSpec((tb, S), lambda i: (i, 0)),    # x tile (S unpadded)
                pl.BlockSpec((S, H), lambda i: (0, 0)),     # W1 (resident)
                pl.BlockSpec((1, H), lambda i: (0, 0)),     # b1
                pl.BlockSpec((H, H), lambda i: (0, 0)),     # W2 (resident)
                pl.BlockSpec((1, H), lambda i: (0, 0)),     # b2
                pl.BlockSpec((1, H), lambda i: (0, 0)),     # W3^T as a row
                pl.BlockSpec(memory_space=pltpu.MemorySpace.SMEM),  # b3 scalar
            ],
            # Lane-dense output: one (1, 1, tb) row per grid step.
            out_specs=pl.BlockSpec((1, 1, tb), lambda i: (i, 0, 0)),
        ),
        compiler_params=pltpu.CompilerParams(
            dimension_semantics=("parallel",)),
        cost_estimate=pl.CostEstimate(
            flops=flops, transcendentals=0, bytes_accessed=bytes_accessed),
    )(x_p, w1c, b1, w2c, b2, w3t, b3)

    # (num_tiles, 1, tb) -> (Bp, 1) -> drop batch padding.
    return out.reshape(Bp, 1)[:B]


def init_params(key, state_dim, hidden=256):
    """Deterministic init mirroring PyTorch Linear's U(-1/sqrt(fan_in), 1/sqrt(fan_in)).
    Weights stored as [in, out]."""
    ks = jax.random.split(key, 6)

    def lin(kw, kb, fan_in, fan_out):
        bound = 1.0 / jnp.sqrt(fan_in)
        w = jax.random.uniform(kw, (fan_in, fan_out), jnp.float32, -bound, bound)
        b = jax.random.uniform(kb, (1, fan_out), jnp.float32, -bound, bound)
        return w, b

    w1, b1 = lin(ks[0], ks[1], state_dim, hidden)
    w2, b2 = lin(ks[2], ks[3], hidden, hidden)
    w3, b3 = lin(ks[4], ks[5], hidden, 1)
    return (w1, b1, w2, b2, w3, b3)


def value_net_ref(x, params):
    w1, b1, w2, b2, w3, b3 = params
    h1 = jnp.maximum(x @ w1 + b1, 0.0)
    h2 = jnp.maximum(h1 @ w2 + b2, 0.0)
    return h2 @ w3 + b3


if __name__ == "__main__":
    key = jax.random.PRNGKey(0)
    k_param, k_x1, k_x2, k_x3 = jax.random.split(key, 4)

    state_dim = 32
    params = init_params(k_param, state_dim)

    # 1) Small batch, f32 matmul inputs: single tile, batch padded to 128 rows.
    x1 = jax.random.normal(k_x1, (16, state_dim), jnp.float32)
    out1 = jax.block_until_ready(
        value_net_forward(x1, params, compute_dtype=jnp.float32))
    ref1 = value_net_ref(x1, params)
    assert out1.shape == (16, 1)
    assert jnp.allclose(out1, ref1, atol=2e-3, rtol=2e-3), "mismatch (B=16, f32)"

    # 2) Batch not a tile multiple, default bf16 matmuls (f32 accumulation):
    #    exercises multi-tile grid + pad/slice; looser tolerance for bf16 inputs.
    x2 = jax.random.normal(k_x2, (200, state_dim), jnp.float32)
    out2 = jax.block_until_ready(value_net_forward(x2, params, tb=128))
    ref2 = value_net_ref(x2, params)
    assert out2.shape == (200, 1)
    assert jnp.allclose(out2, ref2, atol=5e-2, rtol=5e-2), "mismatch (B=200, bf16)"

    # 3) Tile-aligned batch (no wrapper pad), multi-tile grid, f32 matmuls.
    x3 = jax.random.normal(k_x3, (256, state_dim), jnp.float32)
    out3 = jax.block_until_ready(
        value_net_forward(x3, params, tb=128, compute_dtype=jnp.float32))
    ref3 = value_net_ref(x3, params)
    assert out3.shape == (256, 1)
    assert jnp.allclose(out3, ref3, atol=2e-3, rtol=2e-3), "mismatch (B=256, f32)"

    print("KERNEL_OK")
</pallas_src>

<mosaic_0001>
module attributes {stable_mosaic.version = 11 : i64} {
  func.func @valuenet_kernel(%arg0: i32, %arg1: memref<128x32xf32, #tpu.memory_space<vmem>>, %arg2: memref<32x256xf32, #tpu.memory_space<vmem>>, %arg3: memref<1x256xf32, #tpu.memory_space<vmem>>, %arg4: memref<256x256xf32, #tpu.memory_space<vmem>>, %arg5: memref<1x256xf32, #tpu.memory_space<vmem>>, %arg6: memref<1x256xf32, #tpu.memory_space<vmem>>, %arg7: memref<1x1xf32, #tpu.memory_space<smem>>, %arg8: memref<1x1x128xf32, #tpu.memory_space<vmem>>) attributes {dimension_semantics = [#tpu.dimension_semantics<parallel>], iteration_bounds = array<i64: 1>, scalar_prefetch = 0 : i64, scratch_operands = 0 : i64, tpu.core_type = #tpu.core_type<tc>, window_params = [{transform_indices = @transform_0, window_bounds = array<i64: 128, 32>}, {pipeline_mode = #tpu.pipeline_mode<synchronous>, transform_indices = @transform_1, window_bounds = array<i64: 32, 256>}, {pipeline_mode = #tpu.pipeline_mode<synchronous>, transform_indices = @transform_2, window_bounds = array<i64: 1, 256>}, {pipeline_mode = #tpu.pipeline_mode<synchronous>, transform_indices = @transform_3, window_bounds = array<i64: 256, 256>}, {pipeline_mode = #tpu.pipeline_mode<synchronous>, transform_indices = @transform_4, window_bounds = array<i64: 1, 256>}, {pipeline_mode = #tpu.pipeline_mode<synchronous>, transform_indices = @transform_5, window_bounds = array<i64: 1, 256>}, {transform_indices = @transform_6, window_bounds = array<i64: 1, 1>}, {transform_indices = @transform_7, window_bounds = array<i64: 1, 1, 128>}]} {
    %c0 = arith.constant 0 : index
    %c0_0 = arith.constant 0 : index
    %0 = vector.load %arg1[%c0, %c0_0] : memref<128x32xf32, #tpu.memory_space<vmem>>, vector<128x32xf32>
    %c0_1 = arith.constant 0 : index
    %c0_2 = arith.constant 0 : index
    %1 = vector.load %arg2[%c0_1, %c0_2] : memref<32x256xf32, #tpu.memory_space<vmem>>, vector<32x256xf32>
    %cst = arith.constant dense<0.000000e+00> : vector<128x256xf32>
    %2 = tpu.matmul %0, %1, %cst {dimension_numbers = #tpu.dot_dimension_numbers<[1], [0], [0], [1], [0, 0, 1, 1], [], []>} : vector<128x32xf32>, vector<32x256xf32>, vector<128x256xf32> -> vector<128x256xf32>
    %c0_3 = arith.constant 0 : index
    %c0_4 = arith.constant 0 : index
    %3 = vector.load %arg3[%c0_3, %c0_4] : memref<1x256xf32, #tpu.memory_space<vmem>>, vector<1x256xf32>
    %4 = vector.broadcast %3 : vector<1x256xf32> to vector<128x256xf32>
    %5 = arith.addf %2, %4 : vector<128x256xf32>
    %cst_5 = arith.constant 0.000000e+00 : f32
    %6 = vector.broadcast %cst_5 : f32 to vector<128x256xf32>
    %7 = arith.maximumf %5, %6 : vector<128x256xf32>
    %c0_6 = arith.constant 0 : index
    %c0_7 = arith.constant 0 : index
    %8 = vector.load %arg4[%c0_6, %c0_7] : memref<256x256xf32, #tpu.memory_space<vmem>>, vector<256x256xf32>
    %cst_8 = arith.constant dense<0.000000e+00> : vector<128x256xf32>
    %9 = tpu.matmul %7, %8, %cst_8 {dimension_numbers = #tpu.dot_dimension_numbers<[1], [0], [0], [1], [0, 0, 1, 1], [], []>} : vector<128x256xf32>, vector<256x256xf32>, vector<128x256xf32> -> vector<128x256xf32>
    %c0_9 = arith.constant 0 : index
    %c0_10 = arith.constant 0 : index
    %10 = vector.load %arg5[%c0_9, %c0_10] : memref<1x256xf32, #tpu.memory_space<vmem>>, vector<1x256xf32>
    %11 = vector.broadcast %10 : vector<1x256xf32> to vector<128x256xf32>
    %12 = arith.addf %9, %11 : vector<128x256xf32>
    %cst_11 = arith.constant 0.000000e+00 : f32
    %13 = vector.broadcast %cst_11 : f32 to vector<128x256xf32>
    %14 = arith.maximumf %12, %13 : vector<128x256xf32>
    %c0_12 = arith.constant 0 : index
    %c0_13 = arith.constant 0 : index
    %15 = vector.load %arg6[%c0_12, %c0_13] : memref<1x256xf32, #tpu.memory_space<vmem>>, vector<1x256xf32>
    %cst_14 = arith.constant dense<0.000000e+00> : vector<1x128xf32>
    %16 = tpu.matmul %15, %14, %cst_14 {dimension_numbers = #tpu.dot_dimension_numbers<[1], [1], [0], [0], [0, 0, 1, 0], [], []>} : vector<1x256xf32>, vector<128x256xf32>, vector<1x128xf32> -> vector<1x128xf32>
    %c0_15 = arith.constant 0 : index
    %c0_16 = arith.constant 0 : index
    %17 = memref.load %arg7[%c0_15, %c0_16] : memref<1x1xf32, #tpu.memory_space<smem>>
    %18 = vector.broadcast %17 : f32 to vector<1x128xf32>
    %19 = arith.addf %16, %18 : vector<1x128xf32>
    %20 = vector.shape_cast %19 : vector<1x128xf32> to vector<1x1x128xf32>
    %c0_17 = arith.constant 0 : index
    %c0_18 = arith.constant 0 : index
    %c0_19 = arith.constant 0 : index
    %21 = vector.load %arg8[%c0_17, %c0_18, %c0_19] : memref<1x1x128xf32, #tpu.memory_space<vmem>>, vector<1x1x128xf32>
    tpu.vector_store %arg8[%c0_17, %c0_18, %c0_19], %20 {strides = array<i32>} : memref<1x1x128xf32, #tpu.memory_space<vmem>>, vector<1x1x128xf32>,
    return
  }
  func.func @transform_0(%arg0: i32) -> (i32, i32) {
    %c0_i32 = arith.constant 0 : i32
    %c0_i32_0 = arith.constant 0 : i32
    return %arg0, %c0_i32 : i32, i32
  }
  func.func @transform_1(%arg0: i32) -> (i32, i32) {
    %c0_i32 = arith.constant 0 : i32
    %c0_i32_0 = arith.constant 0 : i32
    %c0_i32_1 = arith.constant 0 : i32
    return %c0_i32, %c0_i32_0 : i32, i32
  }
  func.func @transform_2(%arg0: i32) -> (i32, i32) {
    %c0_i32 = arith.constant 0 : i32
    %c0_i32_0 = arith.constant 0 : i32
    %c0_i32_1 = arith.constant 0 : i32
    return %c0_i32, %c0_i32_0 : i32, i32
  }
  func.func @transform_3(%arg0: i32) -> (i32, i32) {
    %c0_i32 = arith.constant 0 : i32
    %c0_i32_0 = arith.constant 0 : i32
    %c0_i32_1 = arith.constant 0 : i32
    return %c0_i32, %c0_i32_0 : i32, i32
  }
  func.func @transform_4(%arg0: i32) -> (i32, i32) {
    %c0_i32 = arith.constant 0 : i32
    %c0_i32_0 = arith.constant 0 : i32
    %c0_i32_1 = arith.constant 0 : i32
    return %c0_i32, %c0_i32_0 : i32, i32
  }
  func.func @transform_5(%arg0: i32) -> (i32, i32) {
    %c0_i32 = arith.constant 0 : i32
    %c0_i32_0 = arith.constant 0 : i32
    %c0_i32_1 = arith.constant 0 : i32
    return %c0_i32, %c0_i32_0 : i32, i32
  }
  func.func @transform_6(%arg0: i32) -> (i32, i32) {
    %c0_i32 = arith.constant 0 : i32
    %c0_i32_0 = arith.constant 0 : i32
    %c0_i32_1 = arith.constant 0 : i32
    return %c0_i32, %c0_i32_0 : i32, i32
  }
  func.func @transform_7(%arg0: i32) -> (i32, i32, i32) {
    %c0_i32 = arith.constant 0 : i32
    %c0_i32_0 = arith.constant 0 : i32
    %c0_i32_1 = arith.constant 0 : i32
    return %arg0, %c0_i32, %c0_i32_0 : i32, i32, i32
  }
}

</mosaic_0001>

<llo_original>
// kernel: tpu_custom_call.1
$region0: #{tpu_custom_call.1}
  #allocation0 [shape = 'u32[]', space=smem, size = 0x4, offset = 0x4, fixed_abs, tag = 'smem constant byte address 0x4 - core index']
  #allocation1 [shape = 'u32[144,128]{1,0:T(1,128)}', space=vmem, size = 0x12000, scoped, tag = 'internal scratch']
  #allocation2 [shape = 'f32[1,1]{1,0:T(1,128)S(6)}', space=smem, size = 0x200, scoped, tag = 'scoped memory for tpu_custom_call.1']
  %s0 = inlined_call_operand.vmem [shape: f32[128,32], index: 0, kind: input, shape index: {}]
  %s1 = inlined_call_operand.vmem [shape: f32[32,256], index: 1, kind: input, shape index: {}]
  %s2 = inlined_call_operand.vmem [shape: f32[1,256], index: 2, kind: input, shape index: {}]
  %s3 = inlined_call_operand.hbm [shape: f32[256,256], index: 3, kind: input, shape index: {}]
  %s4 = inlined_call_operand.vmem [shape: f32[1,256], index: 4, kind: input, shape index: {}]
  %s5 = inlined_call_operand.vmem [shape: f32[1,256], index: 5, kind: input, shape index: {}]
  %s6 = inlined_call_operand.<no memory space> [shape: f32[1,1], index: 6, kind: input, shape index: {}]
  %s7 = inlined_call_operand.hbm [shape: f32[1,1,128], index: 7, kind: output, shape index: {}]
  %s8 = sld [smem:[#allocation0]]
  $region42: #{tpu_custom_call.1} parent=0
    _
  %s10 = ssub.s32 1, %s8
  %s11 = scalar_select 0, %s10, %s8
  %12 = sst [smem:[#allocation2]] %s6
  $region1: #{tpu_custom_call.1} parent=0
    #allocation3 [shape = 'u8[262144]{0}', space=vmem, size = 0x40000, scoped, tag = 'input window, operand 3, single buffered']
    #allocation4 [shape = 's32[1]{0}', space=sflag, size = 0x4, scoped, tag = 'scoped memory for tpu_custom_call.1']
    #allocation5 [shape = 's32[1]{0}', space=sflag, size = 0x4, scoped, tag = 'scoped memory for tpu_custom_call.1']
    #allocation6 [shape = 'u8[512]{0}', space=vmem, size = 0x400, scoped, tag = 'output window, operand 0, single buffered']
    %13 = vsyncpa [#allocation4], 0
    %14 = vsyncpa [#allocation5], 0
    // Predicated region
    $region2: #{tpu_custom_call.1} parent=1 // pred_check
      _
    $region3: #{tpu_custom_call.1} parent=1 // pred_check_branch
      %16 = sbr.rel (0) target = $region5
    $region4: #{tpu_custom_call.1} parent=1 // pred_region
      _
    $region5: #{tpu_custom_call.1} parent=1 // pred_fallthru
      _
    // Predicated region
    $region6: #{tpu_custom_call.1} parent=1 // pred_check
      _
    $region7: #{tpu_custom_call.1} parent=1 // pred_check_branch
      %18 = sbr.rel (0) target = $region9
    $region8: #{tpu_custom_call.1} parent=1 // pred_region
      _
    $region9: #{tpu_custom_call.1} parent=1 // pred_fallthru
      _
    // Predicated region
    $region10: #{tpu_custom_call.1} parent=1 // pred_check
      _
    $region11: #{tpu_custom_call.1} parent=1 // pred_check_branch
      %20 = sbr.rel (0) target = $region13
    $region12: #{tpu_custom_call.1} parent=1 // pred_region
      _
    $region13: #{tpu_custom_call.1} parent=1 // pred_fallthru
      _
    // Predicated region
    $region14: #{tpu_custom_call.1} parent=1 // pred_check
      _
    $region15: #{tpu_custom_call.1} parent=1 // pred_check_branch
      %22 = sbr.rel (0) target = $region17
    $region16: #{tpu_custom_call.1} parent=1 // pred_region
      %s24 = ssub.s32 8192, 8192
      %25 = vsyncadd [#allocation4], %s24
      %s26 = sshll.u32 [#allocation3], 4
      %s27 = int_to_ptr.vmem [resolvable:$true] %s26
      %32 = dma.hbm_to_vmem [thread:$0]  %s3, 8192, %s27, [#allocation4], 256, 256, 16
    $region17: #{tpu_custom_call.1} parent=1 // pred_fallthru
      _
    // Predicated region
    $region18: #{tpu_custom_call.1} parent=1 // pred_check
      _
    $region19: #{tpu_custom_call.1} parent=1 // pred_check_branch
      %34 = sbr.rel (0) target = $region21
    $region20: #{tpu_custom_call.1} parent=1 // pred_region
      _
    $region21: #{tpu_custom_call.1} parent=1 // pred_fallthru
      _
    // Predicated region
    $region22: #{tpu_custom_call.1} parent=1 // pred_check
      _
    $region23: #{tpu_custom_call.1} parent=1 // pred_check_branch
      %36 = sbr.rel (0) target = $region25
    $region24: #{tpu_custom_call.1} parent=1 // pred_region
      _
    $region25: #{tpu_custom_call.1} parent=1 // pred_fallthru
      _
    // Predicated region
    $region26: #{tpu_custom_call.1} parent=1 // pred_check
      _
    $region27: #{tpu_custom_call.1} parent=1 // pred_check_branch
      %38 = sbr.rel (0) target = $region29
    $region28: #{tpu_custom_call.1} parent=1 // pred_region
      _
    $region29: #{tpu_custom_call.1} parent=1 // pred_fallthru
      _
    // Predicated region
    $region30: #{tpu_custom_call.1} parent=1 // pred_check
      _
    $region31: #{tpu_custom_call.1} parent=1 // pred_check_branch
      %40 = sbr.rel (0) target = $region33
    $region32: #{tpu_custom_call.1} parent=1 // pred_region
      %41 = dma.done [#allocation4], 8192
    $region33: #{tpu_custom_call.1} parent=1 // pred_fallthru
      _
    %v42 = vld [vmem:[%s0] sm:$0xff]
    %v43 = vld [vmem:[%s0 + $0x8] sm:$0xff]
    %v44 = vld [vmem:[%s0 + $0x10] sm:$0xff]
    %v45 = vld [vmem:[%s0 + $0x18] sm:$0xff]
    %v46 = vld [vmem:[%s0 + $0x20] sm:$0xff]
    %v47 = vld [vmem:[%s0 + $0x28] sm:$0xff]
    %v48 = vld [vmem:[%s0 + $0x30] sm:$0xff]
    %v49 = vld [vmem:[%s0 + $0x38] sm:$0xff]
    %v50 = vld [vmem:[%s0 + $0x40] sm:$0xff]
    %v51 = vld [vmem:[%s0 + $0x48] sm:$0xff]
    %v52 = vld [vmem:[%s0 + $0x50] sm:$0xff]
    %v53 = vld [vmem:[%s0 + $0x58] sm:$0xff]
    %v54 = vld [vmem:[%s0 + $0x60] sm:$0xff]
    %v55 = vld [vmem:[%s0 + $0x68] sm:$0xff]
    %v56 = vld [vmem:[%s0 + $0x70] sm:$0xff]
    %v57 = vld [vmem:[%s0 + $0x78] sm:$0xff]
    %v58 = vld [vmem:[%s1] sm:$0xff]
    %v59 = vld [vmem:[%s1 + $0x8] sm:$0xff]
    %v60 = vld [vmem:[%s1 + $0x10] sm:$0xff]
    %v61 = vld [vmem:[%s1 + $0x18] sm:$0xff]
    %v62 = vld [vmem:[%s1 + $0x20] sm:$0xff]
    %v63 = vld [vmem:[%s1 + $0x28] sm:$0xff]
    %v64 = vld [vmem:[%s1 + $0x30] sm:$0xff]
    %v65 = vld [vmem:[%s1 + $0x38] sm:$0xff]
    %v66 = vld [vmem:[%s2] sm:$0x3]
    %v68 = vlaneseq
    %v69 = vshrl.u32 %v68, 7
    %v70 = vsub.s32 0, %v69
    %v71 = vrot.slane %v66, %v70
    %v72 = vlaneseq
    %v73 = vshrl.u32 %v72, 7
    %v74 = vsub.s32 1, %v73
    %v75 = vrot.slane %v66, %v74
    %vm78 = vcmask 261120
    %v80 = vsel %vm78, %v42, 0
    %v83 = vsel %vm78, %v43, 0
    %v86 = vsel %vm78, %v44, 0
    %v89 = vsel %vm78, %v45, 0
    %v92 = vsel %vm78, %v46, 0
    %v95 = vsel %vm78, %v47, 0
    %v98 = vsel %vm78, %v48, 0
    %v101 = vsel %vm78, %v49, 0
    %v104 = vsel %vm78, %v50, 0
    %v107 = vsel %vm78, %v51, 0
    %v110 = vsel %vm78, %v52, 0
    %v113 = vsel %vm78, %v53, 0
    %v116 = vsel %vm78, %v54, 0
    %v119 = vsel %vm78, %v55, 0
    %v122 = vsel %vm78, %v56, 0
    %v125 = vsel %vm78, %v57, 0
    %127 = vmatprep.subr.mxu0 0.0
    %128 = vmatpush1.msra.mxu0 0.0
    %129 = vmatprep.subr.mxu0 0.0
    %130 = vmatpush1.msra.mxu0 0.0
    %131 = vmatprep.subr.mxu0 0.0
    %132 = vmatpush1.msra.mxu0 0.0
    %133 = vmatprep.subr.mxu0 0.0
    %134 = vmatpush1.msra.mxu0 0.0
    %135 = vmatprep.subr.mxu0 0.0
    %136 = vmatpush1.msra.mxu0 0.0
    %137 = vmatprep.subr.mxu0 0.0
    %138 = vmatpush1.msra.mxu0 0.0
    %139 = vmatprep.subr.mxu0 0.0
    %140 = vmatpush1.msra.mxu0 0.0
    %141 = vmatprep.subr.mxu0 0.0
    %142 = vmatpush1.msra.mxu0 0.0
    %143 = vmatprep.subr.mxu0 0.0
    %144 = vmatpush1.msra.mxu0 0.0
    %145 = vmatprep.subr.mxu0 0.0
    %146 = vmatpush1.msra.mxu0 0.0
    %147 = vmatprep.subr.mxu0 0.0
    %148 = vmatpush1.msra.mxu0 0.0
    %149 = vmatprep.subr.mxu0 0.0
    %150 = vmatpush1.msra.mxu0 0.0
    %151 = vmatprep.subr.mxu0 %v65
    %152 = vmatpush1.msra.mxu0 %v64
    %153 = vmatprep.subr.mxu0 %v63
    %154 = vmatpush1.msra.mxu0 %v62
    %155 = vmatprep.subr.mxu0 %v61
    %156 = vmatpush1.msra.mxu0 %v60
    %157 = vmatprep.subr.mxu0 %v59
    %158 = vmatpush1.msra.mxu0 %v58
    %159 = vmatprep.subr.mxu0 0.0
    %160 = vmatpush2.msra.mxu0 0.0
    %161 = vmatprep.subr.mxu0 0.0
    %162 = vmatpush2.msra.mxu0 0.0
    %163 = vmatprep.subr.mxu0 0.0
    %164 = vmatpush2.msra.mxu0 0.0
    %165 = vmatprep.subr.mxu0 0.0
    %166 = vmatpush2.msra.mxu0 0.0
    %167 = vmatprep.subr.mxu0 0.0
    %168 = vmatpush2.msra.mxu0 0.0
    %169 = vmatprep.subr.mxu0 0.0
    %170 = vmatpush2.msra.mxu0 0.0
    %171 = vmatprep.subr.mxu0 0.0
    %172 = vmatpush2.msra.mxu0 0.0
    %173 = vmatprep.subr.mxu0 0.0
    %174 = vmatpush2.msra.mxu0 0.0
    %175 = vmatprep.subr.mxu0 0.0
    %176 = vmatpush2.msra.mxu0 0.0
    %177 = vmatprep.subr.mxu0 0.0
    %178 = vmatpush2.msra.mxu0 0.0
    %179 = vmatprep.subr.mxu0 0.0
    %180 = vmatpush2.msra.mxu0 0.0
    %181 = vmatprep.subr.mxu0 0.0
    %182 = vmatpush2.msra.mxu0 0.0
    %183 = vmatprep.subr.mxu0 0.0
    %184 = vmatpush2.msra.mxu0 0.0
    %185 = vmatprep.subr.mxu0 0.0
    %186 = vmatpush2.msra.mxu0 0.0
    %187 = vmatprep.subr.mxu0 0.0
    %188 = vmatpush2.msra.mxu0 0.0
    %189 = vmatprep.subr.mxu0 0.0
    %190 = vmatpush2.msra.mxu0 0.0
    %191 = vmatprep.mubr.f32.mxu0 0.0
    %192 = vmatmul.mubr.f32.gmra.mxu0 %v80
    %v193 = vpop.f32.mrf.mxu0
    %v194 = vadd.f32 %v71, %v193
    %v195 = vpop.f32.mrf.mxu0
    %v196 = vadd.f32 %v75, %v195
    %197 = vmatprep.mubr.f32.mxu0 0.0
    %198 = vmatmul.mubr.f32.gmra.mxu0 %v83
    %v199 = vpop.f32.mrf.mxu0
    %v200 = vadd.f32 %v71, %v199
    %v201 = vpop.f32.mrf.mxu0
    %v202 = vadd.f32 %v75, %v201
    %203 = vmatprep.mubr.f32.mxu0 0.0
    %204 = vmatmul.mubr.f32.gmra.mxu0 %v86
    %v205 = vpop.f32.mrf.mxu0
    %v206 = vadd.f32 %v71, %v205
    %v207 = vpop.f32.mrf.mxu0
    %v208 = vadd.f32 %v75, %v207
    %209 = vmatprep.mubr.f32.mxu0 0.0
    %210 = vmatmul.mubr.f32.gmra.mxu0 %v89
    %v211 = vpop.f32.mrf.mxu0
    %v212 = vadd.f32 %v71, %v211
    %v213 = vpop.f32.mrf.mxu0
    %v214 = vadd.f32 %v75, %v213
    %215 = vmatprep.mubr.f32.mxu0 0.0
    %216 = vmatmul.mubr.f32.gmra.mxu0 %v92
    %v217 = vpop.f32.mrf.mxu0
    %v218 = vadd.f32 %v71, %v217
    %v219 = vpop.f32.mrf.mxu0
    %v220 = vadd.f32 %v75, %v219
    %221 = vmatprep.mubr.f32.mxu0 0.0
    %222 = vmatmul.mubr.f32.gmra.mxu0 %v95
    %v223 = vpop.f32.mrf.mxu0
    %v224 = vadd.f32 %v71, %v223
    %v225 = vpop.f32.mrf.mxu0
    %v226 = vadd.f32 %v75, %v225
    %227 = vmatprep.mubr.f32.mxu0 0.0
    %228 = vmatmul.mubr.f32.gmra.mxu0 %v98
    %v229 = vpop.f32.mrf.mxu0
    %v230 = vadd.f32 %v71, %v229
    %v231 = vpop.f32.mrf.mxu0
    %v232 = vadd.f32 %v75, %v231
    %233 = vmatprep.mubr.f32.mxu0 0.0
    %234 = vmatmul.mubr.f32.gmra.mxu0 %v101
    %v235 = vpop.f32.mrf.mxu0
    %v236 = vadd.f32 %v71, %v235
    %v237 = vpop.f32.mrf.mxu0
    %v238 = vadd.f32 %v75, %v237
    %239 = vmatprep.mubr.f32.mxu0 0.0
    %240 = vmatmul.mubr.f32.gmra.mxu0 %v104
    %v241 = vpop.f32.mrf.mxu0
    %v242 = vadd.f32 %v71, %v241
    %v243 = vpop.f32.mrf.mxu0
    %v244 = vadd.f32 %v75, %v243
    %245 = vmatprep.mubr.f32.mxu0 0.0
    %246 = vmatmul.mubr.f32.gmra.mxu0 %v107
    %v247 = vpop.f32.mrf.mxu0
    %v248 = vadd.f32 %v71, %v247
    %v249 = vpop.f32.mrf.mxu0
    %v250 = vadd.f32 %v75, %v249
    %251 = vmatprep.mubr.f32.mxu0 0.0
    %252 = vmatmul.mubr.f32.gmra.mxu0 %v110
    %v253 = vpop.f32.mrf.mxu0
    %v254 = vadd.f32 %v71, %v253
    %v255 = vpop.f32.mrf.mxu0
    %v256 = vadd.f32 %v75, %v255
    %257 = vmatprep.mubr.f32.mxu0 0.0
    %258 = vmatmul.mubr.f32.gmra.mxu0 %v113
    %v259 = vpop.f32.mrf.mxu0
    %v260 = vadd.f32 %v71, %v259
    %v261 = vpop.f32.mrf.mxu0
    %v262 = vadd.f32 %v75, %v261
    %263 = vmatprep.mubr.f32.mxu0 0.0
    %264 = vmatmul.mubr.f32.gmra.mxu0 %v116
    %v265 = vpop.f32.mrf.mxu0
    %v266 = vadd.f32 %v71, %v265
    %v267 = vpop.f32.mrf.mxu0
    %v268 = vadd.f32 %v75, %v267
    %269 = vmatprep.mubr.f32.mxu0 0.0
    %270 = vmatmul.mubr.f32.gmra.mxu0 %v119
    %v271 = vpop.f32.mrf.mxu0
    %v272 = vadd.f32 %v71, %v271
    %v273 = vpop.f32.mrf.mxu0
    %v274 = vadd.f32 %v75, %v273
    %275 = vmatprep.mubr.f32.mxu0 0.0
    %276 = vmatmul.mubr.f32.gmra.mxu0 %v122
    %v277 = vpop.f32.mrf.mxu0
    %v278 = vadd.f32 %v71, %v277
    %v279 = vpop.f32.mrf.mxu0
    %v280 = vadd.f32 %v75, %v279
    %281 = vmatprep.mubr.f32.mxu0 0.0
    %282 = vmatmul.mubr.f32.gmra.mxu0 %v125
    %v283 = vpop.f32.mrf.mxu0
    %v284 = vadd.f32 %v71, %v283
    %v285 = vpop.f32.mrf.mxu0
    %v286 = vadd.f32 %v75, %v285
    %287 = vdwg.mxu0
    %v288 = vmax.f32 %v194, 0.0
    %v289 = vmax.f32 %v196, 0.0
    %v290 = vmax.f32 %v200, 0.0
    %v291 = vmax.f32 %v202, 0.0
    %v292 = vmax.f32 %v206, 0.0
    %v293 = vmax.f32 %v208, 0.0
    %v294 = vmax.f32 %v212, 0.0
    %v295 = vmax.f32 %v214, 0.0
    %v296 = vmax.f32 %v218, 0.0
    %v297 = vmax.f32 %v220, 0.0
    %v298 = vmax.f32 %v224, 0.0
    %v299 = vmax.f32 %v226, 0.0
    %v300 = vmax.f32 %v230, 0.0
    %v301 = vmax.f32 %v232, 0.0
    %v302 = vmax.f32 %v236, 0.0
    %v303 = vmax.f32 %v238, 0.0
    %v304 = vmax.f32 %v242, 0.0
    %v305 = vmax.f32 %v244, 0.0
    %v306 = vmax.f32 %v248, 0.0
    %v307 = vmax.f32 %v250, 0.0
    %v308 = vmax.f32 %v254, 0.0
    %v309 = vmax.f32 %v256, 0.0
    %v310 = vmax.f32 %v260, 0.0
    %v311 = vmax.f32 %v262, 0.0
    %v312 = vmax.f32 %v266, 0.0
    %v313 = vmax.f32 %v268, 0.0
    %v314 = vmax.f32 %v272, 0.0
    %v315 = vmax.f32 %v274, 0.0
    %v316 = vmax.f32 %v278, 0.0
    %v317 = vmax.f32 %v280, 0.0
    %v318 = vmax.f32 %v284, 0.0
    %v319 = vmax.f32 %v286, 0.0
    %v320 = vld [vmem:[#allocation3] sm:$0xff]
    %v321 = vld [vmem:[#allocation3 + $0x8] sm:$0xff]
    %v322 = vld [vmem:[#allocation3 + $0x10] sm:$0xff]
    %v323 = vld [vmem:[#allocation3 + $0x18] sm:$0xff]
    %v324 = vld [vmem:[#allocation3 + $0x20] sm:$0xff]
    %v325 = vld [vmem:[#allocation3 + $0x28] sm:$0xff]
    %v326 = vld [vmem:[#allocation3 + $0x30] sm:$0xff]
    %v327 = vld [vmem:[#allocation3 + $0x38] sm:$0xff]
    %v328 = vld [vmem:[#allocation3 + $0x40] sm:$0xff]
    %v329 = vld [vmem:[#allocation3 + $0x48] sm:$0xff]
    %v330 = vld [vmem:[#allocation3 + $0x50] sm:$0xff]
    %v331 = vld [vmem:[#allocation3 + $0x58] sm:$0xff]
    %v332 = vld [vmem:[#allocation3 + $0x60] sm:$0xff]
    %v333 = vld [vmem:[#allocation3 + $0x68] sm:$0xff]
    %v334 = vld [vmem:[#allocation3 + $0x70] sm:$0xff]
    %v335 = vld [vmem:[#allocation3 + $0x78] sm:$0xff]
    %v336 = vld [vmem:[#allocation3 + $0x80] sm:$0xff]
    %v337 = vld [vmem:[#allocation3 + $0x88] sm:$0xff]
    %v338 = vld [vmem:[#allocation3 + $0x90] sm:$0xff]
    %v339 = vld [vmem:[#allocation3 + $0x98] sm:$0xff]
    %v340 = vld [vmem:[#allocation3 + $0xa0] sm:$0xff]
    %v341 = vld [vmem:[#allocation3 + $0xa8] sm:$0xff]
    %v342 = vld [vmem:[#allocation3 + $0xb0] sm:$0xff]
    %v343 = vld [vmem:[#allocation3 + $0xb8] sm:$0xff]
    %v344 = vld [vmem:[#allocation3 + $0xc0] sm:$0xff]
    %v345 = vld [vmem:[#allocation3 + $0xc8] sm:$0xff]
    %v346 = vld [vmem:[#allocation3 + $0xd0] sm:$0xff]
    %v347 = vld [vmem:[#allocation3 + $0xd8] sm:$0xff]
    %v348 = vld [vmem:[#allocation3 + $0xe0] sm:$0xff]
    %v349 = vld [vmem:[#allocation3 + $0xe8] sm:$0xff]
    %v350 = vld [vmem:[#allocation3 + $0xf0] sm:$0xff]
    %v351 = vld [vmem:[#allocation3 + $0xf8] sm:$0xff]
    %v352 = vld [vmem:[#allocation3 + $0x100] sm:$0xff]
    %v353 = vld [vmem:[#allocation3 + $0x108] sm:$0xff]
    %v354 = vld [vmem:[#allocation3 + $0x110] sm:$0xff]
    %v355 = vld [vmem:[#allocation3 + $0x118] sm:$0xff]
    %v356 = vld [vmem:[#allocation3 + $0x120] sm:$0xff]
    %v357 = vld [vmem:[#allocation3 + $0x128] sm:$0xff]
    %v358 = vld [vmem:[#allocation3 + $0x130] sm:$0xff]
    %v359 = vld [vmem:[#allocation3 + $0x138] sm:$0xff]
    %v360 = vld [vmem:[#allocation3 + $0x140] sm:$0xff]
    %v361 = vld [vmem:[#allocation3 + $0x148] sm:$0xff]
    %v362 = vld [vmem:[#allocation3 + $0x150] sm:$0xff]
    %v363 = vld [vmem:[#allocation3 + $0x158] sm:$0xff]
    %v364 = vld [vmem:[#allocation3 + $0x160] sm:$0xff]
    %v365 = vld [vmem:[#allocation3 + $0x168] sm:$0xff]
    %v366 = vld [vmem:[#allocation3 + $0x170] sm:$0xff]
    %v367 = vld [vmem:[#allocation3 + $0x178] sm:$0xff]
    %v368 = vld [vmem:[#allocation3 + $0x180] sm:$0xff]
    %v369 = vld [vmem:[#allocation3 + $0x188] sm:$0xff]
    %v370 = vld [vmem:[#allocation3 + $0x190] sm:$0xff]
    %v371 = vld [vmem:[#allocation3 + $0x198] sm:$0xff]
    %v372 = vld [vmem:[#allocation3 + $0x1a0] sm:$0xff]
    %v373 = vld [vmem:[#allocation3 + $0x1a8] sm:$0xff]
    %v374 = vld [vmem:[#allocation3 + $0x1b0] sm:$0xff]
    %v375 = vld [vmem:[#allocation3 + $0x1b8] sm:$0xff]
    %v376 = vld [vmem:[#allocation3 + $0x1c0] sm:$0xff]
    %v377 = vld [vmem:[#allocation3 + $0x1c8] sm:$0xff]
    %v378 = vld [vmem:[#allocation3 + $0x1d0] sm:$0xff]
    %v379 = vld [vmem:[#allocation3 + $0x1d8] sm:$0xff]
    %v380 = vld [vmem:[#allocation3 + $0x1e0] sm:$0xff]
    %v381 = vld [vmem:[#allocation3 + $0x1e8] sm:$0xff]
    %v382 = vld [vmem:[#allocation3 + $0x1f0] sm:$0xff]
    %v383 = vld [vmem:[#allocation3 + $0x1f8] sm:$0xff]
    %v384 = vld [vmem:[%s4] sm:$0x3]
    %v386 = vlaneseq
    %v387 = vshrl.u32 %v386, 7
    %v388 = vsub.s32 0, %v387
    %v389 = vrot.slane %v384, %v388
    %v390 = vlaneseq
    %v391 = vshrl.u32 %v390, 7
    %v392 = vsub.s32 1, %v391
    %v393 = vrot.slane %v384, %v392
    %396 = vmatprep.subr.mxu0 %v351
    %397 = vmatpush1.msra.mxu0 %v350
    %398 = vmatprep.subr.mxu0 %v349
    %399 = vmatpush1.msra.mxu0 %v348
    %400 = vmatprep.subr.mxu0 %v347
    %401 = vmatpush1.msra.mxu0 %v346
    %402 = vmatprep.subr.mxu0 %v345
    %403 = vmatpush1.msra.mxu0 %v344
    %404 = vmatprep.subr.mxu0 %v343
    %405 = vmatpush1.msra.mxu0 %v342
    %406 = vmatprep.subr.mxu0 %v341
    %407 = vmatpush1.msra.mxu0 %v340
    %408 = vmatprep.subr.mxu0 %v339
    %409 = vmatpush1.msra.mxu0 %v338
    %410 = vmatprep.subr.mxu0 %v337
    %411 = vmatpush1.msra.mxu0 %v336
    %412 = vmatprep.subr.mxu0 %v335
    %413 = vmatpush1.msra.mxu0 %v334
    %414 = vmatprep.subr.mxu0 %v333
    %415 = vmatpush1.msra.mxu0 %v332
    %416 = vmatprep.subr.mxu0 %v331
    %417 = vmatpush1.msra.mxu0 %v330
    %418 = vmatprep.subr.mxu0 %v329
    %419 = vmatpush1.msra.mxu0 %v328
    %420 = vmatprep.subr.mxu0 %v327
    %421 = vmatpush1.msra.mxu0 %v326
    %422 = vmatprep.subr.mxu0 %v325
    %423 = vmatpush1.msra.mxu0 %v324
    %424 = vmatprep.subr.mxu0 %v323
    %425 = vmatpush1.msra.mxu0 %v322
    %426 = vmatprep.subr.mxu0 %v321
    %427 = vmatpush1.msra.mxu0 %v320
    %428 = vmatprep.subr.mxu0 %v383
    %429 = vmatpush2.msra.mxu0 %v382
    %430 = vmatprep.subr.mxu0 %v381
    %431 = vmatpush2.msra.mxu0 %v380
    %432 = vmatprep.subr.mxu0 %v379
    %433 = vmatpush2.msra.mxu0 %v378
    %434 = vmatprep.subr.mxu0 %v377
    %435 = vmatpush2.msra.mxu0 %v376
    %436 = vmatprep.subr.mxu0 %v375
    %437 = vmatpush2.msra.mxu0 %v374
    %438 = vmatprep.subr.mxu0 %v373
    %439 = vmatpush2.msra.mxu0 %v372
    %440 = vmatprep.subr.mxu0 %v371
    %441 = vmatpush2.msra.mxu0 %v370
    %442 = vmatprep.subr.mxu0 %v369
    %443 = vmatpush2.msra.mxu0 %v368
    %444 = vmatprep.subr.mxu0 %v367
    %445 = vmatpush2.msra.mxu0 %v366
    %446 = vmatprep.subr.mxu0 %v365
    %447 = vmatpush2.msra.mxu0 %v364
    %448 = vmatprep.subr.mxu0 %v363
    %449 = vmatpush2.msra.mxu0 %v362
    %450 = vmatprep.subr.mxu0 %v361
    %451 = vmatpush2.msra.mxu0 %v360
    %452 = vmatprep.subr.mxu0 %v359
    %453 = vmatpush2.msra.mxu0 %v358
    %454 = vmatprep.subr.mxu0 %v357
    %455 = vmatpush2.msra.mxu0 %v356
    %456 = vmatprep.subr.mxu0 %v355
    %457 = vmatpush2.msra.mxu0 %v354
    %458 = vmatprep.subr.mxu0 %v353
    %459 = vmatpush2.msra.mxu0 %v352
    %460 = vmatprep.mubr.f32.mxu0 %v289
    %461 = vmatmul.mubr.f32.gmra.mxu0 %v288
    %v462 = vpop.f32.mrf.mxu0
    %v463 = vadd.f32 %v389, %v462
    %v464 = vpop.f32.mrf.mxu0
    %v465 = vadd.f32 %v393, %v464
    %466 = vmatprep.mubr.f32.mxu0 %v291
    %467 = vmatmul.mubr.f32.gmra.mxu0 %v290
    %v468 = vpop.f32.mrf.mxu0
    %v469 = vadd.f32 %v389, %v468
    %v470 = vpop.f32.mrf.mxu0
    %v471 = vadd.f32 %v393, %v470
    %472 = vmatprep.mubr.f32.mxu0 %v293
    %473 = vmatmul.mubr.f32.gmra.mxu0 %v292
    %v474 = vpop.f32.mrf.mxu0
    %v475 = vadd.f32 %v389, %v474
    %v476 = vpop.f32.mrf.mxu0
    %v477 = vadd.f32 %v393, %v476
    %478 = vmatprep.mubr.f32.mxu0 %v295
    %479 = vmatmul.mubr.f32.gmra.mxu0 %v294
    %v480 = vpop.f32.mrf.mxu0
    %v481 = vadd.f32 %v389, %v480
    %v482 = vpop.f32.mrf.mxu0
    %v483 = vadd.f32 %v393, %v482
    %484 = vmatprep.mubr.f32.mxu0 %v297
    %485 = vmatmul.mubr.f32.gmra.mxu0 %v296
    %v486 = vpop.f32.mrf.mxu0
    %v487 = vadd.f32 %v389, %v486
    %v488 = vpop.f32.mrf.mxu0
    %v489 = vadd.f32 %v393, %v488
    %490 = vmatprep.mubr.f32.mxu0 %v299
    %491 = vmatmul.mubr.f32.gmra.mxu0 %v298
    %v492 = vpop.f32.mrf.mxu0
    %v493 = vadd.f32 %v389, %v492
    %v494 = vpop.f32.mrf.mxu0
    %v495 = vadd.f32 %v393, %v494
    %496 = vmatprep.mubr.f32.mxu0 %v301
    %497 = vmatmul.mubr.f32.gmra.mxu0 %v300
    %v498 = vpop.f32.mrf.mxu0
    %v499 = vadd.f32 %v389, %v498
    %v500 = vpop.f32.mrf.mxu0
    %v501 = vadd.f32 %v393, %v500
    %502 = vmatprep.mubr.f32.mxu0 %v303
    %503 = vmatmul.mubr.f32.gmra.mxu0 %v302
    %v504 = vpop.f32.mrf.mxu0
    %v505 = vadd.f32 %v389, %v504
    %v506 = vpop.f32.mrf.mxu0
    %v507 = vadd.f32 %v393, %v506
    %508 = vmatprep.mubr.f32.mxu0 %v305
    %509 = vmatmul.mubr.f32.gmra.mxu0 %v304
    %v510 = vpop.f32.mrf.mxu0
    %v511 = vadd.f32 %v389, %v510
    %v512 = vpop.f32.mrf.mxu0
    %v513 = vadd.f32 %v393, %v512
    %514 = vmatprep.mubr.f32.mxu0 %v307
    %515 = vmatmul.mubr.f32.gmra.mxu0 %v306
    %v516 = vpop.f32.mrf.mxu0
    %v517 = vadd.f32 %v389, %v516
    %v518 = vpop.f32.mrf.mxu0
    %v519 = vadd.f32 %v393, %v518
    %520 = vmatprep.mubr.f32.mxu0 %v309
    %521 = vmatmul.mubr.f32.gmra.mxu0 %v308
    %v522 = vpop.f32.mrf.mxu0
    %v523 = vadd.f32 %v389, %v522
    %v524 = vpop.f32.mrf.mxu0
    %v525 = vadd.f32 %v393, %v524
    %526 = vmatprep.mubr.f32.mxu0 %v311
    %527 = vmatmul.mubr.f32.gmra.mxu0 %v310
    %v528 = vpop.f32.mrf.mxu0
    %v529 = vadd.f32 %v389, %v528
    %v530 = vpop.f32.mrf.mxu0
    %v531 = vadd.f32 %v393, %v530
    %532 = vmatprep.mubr.f32.mxu0 %v313
    %533 = vmatmul.mubr.f32.gmra.mxu0 %v312
    %v534 = vpop.f32.mrf.mxu0
    %v535 = vadd.f32 %v389, %v534
    %v536 = vpop.f32.mrf.mxu0
    %v537 = vadd.f32 %v393, %v536
    %538 = vmatprep.mubr.f32.mxu0 %v315
    %539 = vmatmul.mubr.f32.gmra.mxu0 %v314
    %v540 = vpop.f32.mrf.mxu0
    %v541 = vadd.f32 %v389, %v540
    %v542 = vpop.f32.mrf.mxu0
    %v543 = vadd.f32 %v393, %v542
    %544 = vmatprep.mubr.f32.mxu0 %v317
    %545 = vmatmul.mubr.f32.gmra.mxu0 %v316
    %v546 = vpop.f32.mrf.mxu0
    %v547 = vadd.f32 %v389, %v546
    %v548 = vpop.f32.mrf.mxu0
    %v549 = vadd.f32 %v393, %v548
    %550 = vmatprep.mubr.f32.mxu0 %v319
    %551 = vmatmul.mubr.f32.gmra.mxu0 %v318
    %v552 = vpop.f32.mrf.mxu0
    %v553 = vadd.f32 %v389, %v552
    %v554 = vpop.f32.mrf.mxu0
    %v555 = vadd.f32 %v393, %v554
    %556 = vdwg.mxu0
    %v557 = vmax.f32 %v463, 0.0
    %v558 = vmax.f32 %v465, 0.0
    %v559 = vmax.f32 %v469, 0.0
    %v560 = vmax.f32 %v471, 0.0
    %v561 = vmax.f32 %v475, 0.0
    %v562 = vmax.f32 %v477, 0.0
    %v563 = vmax.f32 %v481, 0.0
    %v564 = vmax.f32 %v483, 0.0
    %v565 = vmax.f32 %v487, 0.0
    %v566 = vmax.f32 %v489, 0.0
    %v567 = vmax.f32 %v493, 0.0
    %v568 = vmax.f32 %v495, 0.0
    %v569 = vmax.f32 %v499, 0.0
    %v570 = vmax.f32 %v501, 0.0
    %v571 = vmax.f32 %v505, 0.0
    %v572 = vmax.f32 %v507, 0.0
    %v573 = vmax.f32 %v511, 0.0
    %v574 = vmax.f32 %v513, 0.0
    %v575 = vmax.f32 %v517, 0.0
    %v576 = vmax.f32 %v519, 0.0
    %v577 = vmax.f32 %v523, 0.0
    %v578 = vmax.f32 %v525, 0.0
    %v579 = vmax.f32 %v529, 0.0
    %v580 = vmax.f32 %v531, 0.0
    %v581 = vmax.f32 %v535, 0.0
    %v582 = vmax.f32 %v537, 0.0
    %v583 = vmax.f32 %v541, 0.0
    %v584 = vmax.f32 %v543, 0.0
    %v585 = vmax.f32 %v547, 0.0
    %v586 = vmax.f32 %v549, 0.0
    %v587 = vmax.f32 %v553, 0.0
    %v588 = vmax.f32 %v555, 0.0
    %v589 = vld [vmem:[%s5] sm:$0x3]
    %s590 = sld [smem:[#allocation2]]
    %v591 = vstv %s590
    %v593 = vlaneseq
    %v594 = vshrl.u32 %v593, 7
    %v595 = vsub.s32 0, %v594
    %v596 = vrot.slane %v589, %v595
    %v597 = vlaneseq
    %v598 = vshrl.u32 %v597, 7
    %v599 = vsub.s32 1, %v598
    %v600 = vrot.slane %v589, %v599
    %603 = vmatprep.subr.mxu0 %v588
    %604 = vmatpush1.xpose.msra.mxu0 %v587
    %605 = vmatprep.subr.mxu0 %v586
    %606 = vmatpush1.xpose.msra.mxu0 %v585
    %607 = vmatprep.subr.mxu0 %v584
    %608 = vmatpush1.xpose.msra.mxu0 %v583
    %609 = vmatprep.subr.mxu0 %v582
    %610 = vmatpush1.xpose.msra.mxu0 %v581
    %611 = vmatprep.subr.mxu0 %v580
    %612 = vmatpush1.xpose.msra.mxu0 %v579
    %613 = vmatprep.subr.mxu0 %v578
    %614 = vmatpush1.xpose.msra.mxu0 %v577
    %615 = vmatprep.subr.mxu0 %v576
    %616 = vmatpush1.xpose.msra.mxu0 %v575
    %617 = vmatprep.subr.mxu0 %v574
    %618 = vmatpush1.xpose.msra.mxu0 %v573
    %619 = vmatprep.subr.mxu0 %v572
    %620 = vmatpush1.xpose.msra.mxu0 %v571
    %621 = vmatprep.subr.mxu0 %v570
    %622 = vmatpush1.xpose.msra.mxu0 %v569
    %623 = vmatprep.subr.mxu0 %v568
    %624 = vmatpush1.xpose.msra.mxu0 %v567
    %625 = vmatprep.subr.mxu0 %v566
    %626 = vmatpush1.xpose.msra.mxu0 %v565
    %627 = vmatprep.subr.mxu0 %v564
    %628 = vmatpush1.xpose.msra.mxu0 %v563
    %629 = vmatprep.subr.mxu0 %v562
    %630 = vmatpush1.xpose.msra.mxu0 %v561
    %631 = vmatprep.subr.mxu0 %v560
    %632 = vmatpush1.xpose.msra.mxu0 %v559
    %633 = vmatprep.subr.mxu0 %v558
    %634 = vmatpush1.xpose.msra.mxu0 %v557
    %635 = vmatprep.subr.mxu0 0.0
    %636 = vmatpush2.xpose.msra.mxu0 0.0
    %637 = vmatprep.subr.mxu0 0.0
    %638 = vmatpush2.xpose.msra.mxu0 0.0
    %639 = vmatprep.subr.mxu0 0.0
    %640 = vmatpush2.xpose.msra.mxu0 0.0
    %641 = vmatprep.subr.mxu0 0.0
    %642 = vmatpush2.xpose.msra.mxu0 0.0
    %643 = vmatprep.subr.mxu0 0.0
    %644 = vmatpush2.xpose.msra.mxu0 0.0
    %645 = vmatprep.subr.mxu0 0.0
    %646 = vmatpush2.xpose.msra.mxu0 0.0
    %647 = vmatprep.subr.mxu0 0.0
    %648 = vmatpush2.xpose.msra.mxu0 0.0
    %649 = vmatprep.subr.mxu0 0.0
    %650 = vmatpush2.xpose.msra.mxu0 0.0
    %651 = vmatprep.subr.mxu0 0.0
    %652 = vmatpush2.xpose.msra.mxu0 0.0
    %653 = vmatprep.subr.mxu0 0.0
    %654 = vmatpush2.xpose.msra.mxu0 0.0
    %655 = vmatprep.subr.mxu0 0.0
    %656 = vmatpush2.xpose.msra.mxu0 0.0
    %657 = vmatprep.subr.mxu0 0.0
    %658 = vmatpush2.xpose.msra.mxu0 0.0
    %659 = vmatprep.subr.mxu0 0.0
    %660 = vmatpush2.xpose.msra.mxu0 0.0
    %661 = vmatprep.subr.mxu0 0.0
    %662 = vmatpush2.xpose.msra.mxu0 0.0
    %663 = vmatprep.subr.mxu0 0.0
    %664 = vmatpush2.xpose.msra.mxu0 0.0
    %665 = vmatprep.subr.mxu0 0.0
    %666 = vmatpush2.xpose.msra.mxu0 0.0
    %667 = vmatprep.mubr.f32.mxu0 %v600
    %668 = vmatmul.mubr.f32.gmra.mxu0 %v596
    %v669 = vpop.f32.mrf.mxu0
    %v670 = vadd.f32 %v591, %v669
    %v671 = vpop.f32.mrf.mxu0
    %672 = vdwg.mxu0
    %673 = vst [vmem:[#allocation6] sm:$0x1] %v670
    // Predicated region
    $region34: #{tpu_custom_call.1} parent=1 // pred_check
      _
    $region35: #{tpu_custom_call.1} parent=1 // pred_check_branch
      %675 = sbr.rel (0) target = $region37
    $region36: #{tpu_custom_call.1} parent=1 // pred_region
      %s677 = ssub.s32 16, 16
      %678 = vsyncadd [#allocation5], %s677
      %s680 = sshll.u32 [#allocation6], 4
      %s681 = int_to_ptr.vmem [resolvable:$true] %s680
      %683 = dma.vmem_to_hbm [thread:$0]  %s681, 16, %s7, [#allocation5]
    $region37: #{tpu_custom_call.1} parent=1 // pred_fallthru
      _
    // Predicated region
    $region38: #{tpu_custom_call.1} parent=1 // pred_check
      _
    $region39: #{tpu_custom_call.1} parent=1 // pred_check_branch
      %685 = sbr.rel (0) target = $region41
    $region40: #{tpu_custom_call.1} parent=1 // pred_region
      %686 = dma.done [#allocation5], 16
    $region41: #{tpu_custom_call.1} parent=1 // pred_fallthru
      _
    %687 = vsyncpa [#allocation4], 1
    %688 = vsyncpa [#allocation5], 1

</llo_original>
